<compile_context>
chip_gen: v7x
topology: tpu7x:2x2x1
jax: 0.10.0
libtpu: 0.0.40
codegen_flags: <defaults>
</compile_context>

<pallas_src>
import jax
import jax.numpy as jnp
from jax.experimental import pallas as pl
from jax.experimental.pallas import tpu as pltpu


def _round_up(x, m):
    return (x + m - 1) // m * m


def _largest_tile(dim, cap, step):
    """Largest multiple of `step`, <= cap, dividing `dim` (dim % step == 0)."""
    if dim <= cap:
        return dim
    for c in range(cap, step - 1, -step):
        if dim % c == 0:
            return c
    return step


def _vmem_capacity_bytes():
    try:
        info = pltpu.get_tpu_info()
        cap = getattr(info, "vmem_capacity_bytes", None)
        if cap:
            return int(cap)
    except Exception:
        pass
    return 64 * 1024 * 1024  # conservative (v7x-sized) fallback


# ----------------------------- kernels --------------------------------------

def _proj_bn_relu_kernel_multik(x_ref, w_ref, shift_ref, o_ref, acc_ref):
    """One (tm, tn) output tile, reduced over the K grid axis (axis 2)."""
    k = pl.program_id(2)

    @pl.when(k == 0)
    def _init():
        # Fold the per-channel shift into the accumulator init: epilogue
        # becomes just ReLU + cast.
        acc_ref[...] = jnp.broadcast_to(shift_ref[...], acc_ref.shape)

    acc_ref[...] += jnp.dot(x_ref[...], w_ref[...],
                            preferred_element_type=jnp.float32)

    @pl.when(k == pl.num_programs(2) - 1)
    def _finalize():
        o_ref[...] = jnp.maximum(acc_ref[...], 0.0).astype(o_ref.dtype)


def _proj_bn_relu_kernel_singlek(x_ref, w_ref, shift_ref, o_ref):
    """Single-K-step variant: no accumulator scratch, fused epilogue."""
    y = jnp.dot(x_ref[...], w_ref[...], preferred_element_type=jnp.float32)
    y = y + shift_ref[...]
    o_ref[...] = jnp.maximum(y, 0.0).astype(o_ref.dtype)


# ------------------------- parameter preparation ----------------------------

def prepare_projection_params(params, *, eps=1e-5, compute_dtype=jnp.bfloat16):
    """One-time prep: BN fold (f32), transpose, K/OUT padding to 256, cast."""
    W = params["W"].astype(jnp.float32)            # (out, in) - PyTorch layout
    b = params["b"].astype(jnp.float32)
    gamma = params["gamma"].astype(jnp.float32)
    beta = params["beta"].astype(jnp.float32)
    mu = params["running_mean"].astype(jnp.float32)
    var = params["running_var"].astype(jnp.float32)

    out_features, in_features = W.shape

    scale = gamma * jax.lax.rsqrt(var + eps)       # (out,)
    shift = (b - mu) * scale + beta                # (out,)

    W_folded = W.T * scale[None, :]                # (in, out), f32

    # Pad K and OUT to multiples of 256: zero rows/cols are numerically exact,
    # keep tk bounded (never the full-K fallback) and >= 256, and make N tiles
    # MXU-sized with lane-dense output stores.
    in_p = _round_up(in_features, 256)
    out_p = _round_up(out_features, 256)
    W_folded = jnp.pad(W_folded,
                       ((0, in_p - in_features), (0, out_p - out_features)))
    shift = jnp.pad(shift, (0, out_p - out_features))

    return {
        "W_folded": W_folded.astype(compute_dtype),           # (Kp, OUTp)
        "shift": shift.reshape(1, out_p).astype(jnp.float32),  # (1, OUTp) f32
        "in_features": in_features,
        "out_features": out_features,
        "compute_dtype": compute_dtype,
    }


# ------------------------------ forward -------------------------------------

def adaptive_feature_projection(x, prepared, *, out_dtype=jnp.float32):
    """Eval-mode forward. x: (B, in_features) -> (B, out_features).

    `prepared is None` means the identity branch (in_features == out_features).
    """
    if prepared is None:
        return x

    W = prepared["W_folded"]                       # (Kp, OUTp)
    shift = prepared["shift"]                      # (1, OUTp)
    compute_dtype = prepared["compute_dtype"]
    out_features = prepared["out_features"]
    in_features = prepared["in_features"]
    Kp, OUTp = W.shape
    B = x.shape[0]

    # ---- generation-aware tile caps -----------------------------------------
    vmem_cap = _vmem_capacity_bytes()
    big_vmem = vmem_cap > 96 * 1024 * 1024         # v5e / v6e: 128 MiB VMEM
    if big_vmem:
        tm_cap, tn_cap, tk_cap = 512, 1024, 1024
        vmem_budget = 96 * 1024 * 1024
        two_cores = False                          # 1 TensorCore per chip
    else:                                          # v7x: 64 MiB VMEM, 2 TCs
        tm_cap, tn_cap, tk_cap = 256, 512, 512
        vmem_budget = 52 * 1024 * 1024             # headroom under 64 MiB
        two_cores = True

    # ---- tile selection ------------------------------------------------------
    sublane = 16 if jnp.dtype(compute_dtype).itemsize == 2 else 8
    if B <= tm_cap:
        tm = _round_up(B, sublane)                 # sublane-aligned full-B tile
        Bp = tm
    else:
        tm = tm_cap
        Bp = _round_up(B, tm)

    tn = _largest_tile(OUTp, tn_cap, 256)          # OUTp is a multiple of 256
    tk = _largest_tile(Kp, tk_cap, 256)            # Kp   is a multiple of 256

    # Make sure both TensorCores get work on v7x (parallel grid >= 2).
    if two_cores and (Bp // tm) * (OUTp // tn) < 2 and tn >= 256:
        tn //= 2

    # ---- input cast + pad (single fused pre-expression) ---------------------
    x_c = x.astype(compute_dtype)
    pad_b = Bp - B
    pad_k = Kp - in_features
    if pad_b or pad_k:
        x_c = jnp.pad(x_c, ((0, pad_b), (0, pad_k)))

    k_steps = Kp // tk
    grid_mn = (Bp // tm, OUTp // tn)

    # ---- VMEM working-set estimate -------------------------------------------
    itemsize = jnp.dtype(compute_dtype).itemsize
    out_itemsize = jnp.dtype(out_dtype).itemsize
    vmem_est = (2 * (tm * tk + tk * tn) * itemsize      # x + W, double-buffered
                + 2 * 8 * tn * 4                        # shift (sublane-padded)
                + 2 * tm * tn * out_itemsize            # output tiles
                + (tm * tn * 4 if k_steps > 1 else 0))  # f32 accumulator
    vmem_limit = int(min(vmem_budget, max(32 * 1024 * 1024, 2 * vmem_est)))

    # ---- dispatch: accumulator-free fast path when a single K step suffices --
    if k_steps == 1:
        kernel = _proj_bn_relu_kernel_singlek
        grid = grid_mn
        in_specs = [
            pl.BlockSpec((tm, tk), lambda i, j: (i, 0)),   # x tile
            pl.BlockSpec((tk, tn), lambda i, j: (0, j)),   # W tile
            pl.BlockSpec((1, tn), lambda i, j: (0, j)),    # shift tile
        ]
        out_specs = pl.BlockSpec((tm, tn), lambda i, j: (i, j))
        scratch_shapes = []
        dim_sem = ("parallel", "parallel")
    else:
        kernel = _proj_bn_relu_kernel_multik
        grid = grid_mn + (k_steps,)
        in_specs = [
            pl.BlockSpec((tm, tk), lambda i, j, k: (i, k)),
            pl.BlockSpec((tk, tn), lambda i, j, k: (k, j)),
            pl.BlockSpec((1, tn), lambda i, j, k: (0, j)),
        ]
        out_specs = pl.BlockSpec((tm, tn), lambda i, j, k: (i, j))
        scratch_shapes = [pltpu.VMEM((tm, tn), jnp.float32)]
        dim_sem = ("parallel", "parallel", "arbitrary")

    out = pl.pallas_call(
        kernel,
        out_shape=jax.ShapeDtypeStruct((Bp, OUTp), out_dtype),
        grid_spec=pltpu.PrefetchScalarGridSpec(
            num_scalar_prefetch=0,
            grid=grid,
            in_specs=in_specs,
            out_specs=out_specs,
            scratch_shapes=scratch_shapes,
        ),
        compiler_params=pltpu.CompilerParams(
            dimension_semantics=dim_sem,
            vmem_limit_bytes=vmem_limit,
        ),
    )(x_c, W, shift)

    if Bp != B or OUTp != out_features:
        out = out[:B, :out_features]
    return out


# ------------------------------ reference -----------------------------------

def _reference(x, params, eps=1e-5):
    y = x @ params["W"].T + params["b"]
    y = (y - params["running_mean"]) / jnp.sqrt(params["running_var"] + eps)
    y = y * params["gamma"] + params["beta"]
    return jnp.maximum(y, 0.0)


if __name__ == "__main__":
    key = jax.random.PRNGKey(0)
    B, in_features, out_features = 8, 16, 32

    k_x, k_w, k_b, k_g, k_be, k_m, k_v = jax.random.split(key, 7)
    x = jax.random.normal(k_x, (B, in_features), dtype=jnp.float32)

    # Deterministic synthetic parameters (Linear + BatchNorm1d running state).
    params = {
        "W": jax.random.normal(k_w, (out_features, in_features), jnp.float32) * 0.1,
        "b": jax.random.normal(k_b, (out_features,), jnp.float32) * 0.1,
        "gamma": 1.0 + 0.1 * jax.random.normal(k_g, (out_features,), jnp.float32),
        "beta": 0.1 * jax.random.normal(k_be, (out_features,), jnp.float32),
        "running_mean": 0.1 * jax.random.normal(k_m, (out_features,), jnp.float32),
        "running_var": jnp.abs(1.0 + 0.1 * jax.random.normal(k_v, (out_features,),
                                                             jnp.float32)),
    }

    ref = _reference(x, params)

    # Identity branch (in_features == out_features): module is a passthrough.
    assert adaptive_feature_projection(x, None) is x

    # f32 path: exact-semantics check against the reference.
    prep_f32 = prepare_projection_params(params, compute_dtype=jnp.float32)
    out_f32 = jax.block_until_ready(adaptive_feature_projection(x, prep_f32))
    assert out_f32.shape == (B, out_features)
    assert jnp.allclose(out_f32, ref, atol=1e-5, rtol=1e-5)

    # bf16 fast path (default): bf16 MXU operands, f32 accumulation + epilogue.
    prep_bf16 = prepare_projection_params(params)       # compute_dtype=bfloat16
    out_bf16 = jax.block_until_ready(adaptive_feature_projection(x, prep_bf16))
    assert out_bf16.shape == (B, out_features)
    assert jnp.allclose(out_bf16, ref, atol=3e-2, rtol=3e-2)

    # bf16 output dtype (halves writeback for downstream bf16 consumers).
    out_lo = jax.block_until_ready(
        adaptive_feature_projection(x, prep_bf16, out_dtype=jnp.bfloat16))
    assert out_lo.shape == (B, out_features) and out_lo.dtype == jnp.bfloat16
    assert jnp.allclose(out_lo.astype(jnp.float32), ref, atol=5e-2, rtol=5e-2)

    print("KERNEL_OK")
</pallas_src>

<mosaic_0001>
module attributes {stable_mosaic.version = 11 : i64} {
  func.func @_proj_bn_relu_kernel_singlek(%arg0: i32, %arg1: i32, %arg2: memref<8x256xf32, #tpu.memory_space<vmem>>, %arg3: memref<256x128xf32, #tpu.memory_space<vmem>>, %arg4: memref<1x128xf32, #tpu.memory_space<vmem>>, %arg5: memref<8x128xf32, #tpu.memory_space<vmem>>) attributes {dimension_semantics = [#tpu.dimension_semantics<parallel>, #tpu.dimension_semantics<parallel>], iteration_bounds = array<i64: 1, 2>, scalar_prefetch = 0 : i64, scratch_operands = 0 : i64, tpu.core_type = #tpu.core_type<tc>, window_params = [{transform_indices = @transform_0, window_bounds = array<i64: 8, 256>}, {transform_indices = @transform_1, window_bounds = array<i64: 256, 128>}, {transform_indices = @transform_2, window_bounds = array<i64: 1, 128>}, {transform_indices = @transform_3, window_bounds = array<i64: 8, 128>}]} {
    %c0 = arith.constant 0 : index
    %c0_0 = arith.constant 0 : index
    %0 = vector.load %arg2[%c0, %c0_0] : memref<8x256xf32, #tpu.memory_space<vmem>>, vector<8x256xf32>
    %c0_1 = arith.constant 0 : index
    %c0_2 = arith.constant 0 : index
    %1 = vector.load %arg3[%c0_1, %c0_2] : memref<256x128xf32, #tpu.memory_space<vmem>>, vector<256x128xf32>
    %cst = arith.constant dense<0.000000e+00> : vector<8x128xf32>
    %2 = tpu.matmul %0, %1, %cst {dimension_numbers = #tpu.dot_dimension_numbers<[1], [0], [0], [1], [0, 0, 1, 1], [], []>} : vector<8x256xf32>, vector<256x128xf32>, vector<8x128xf32> -> vector<8x128xf32>
    %c0_3 = arith.constant 0 : index
    %c0_4 = arith.constant 0 : index
    %3 = vector.load %arg4[%c0_3, %c0_4] : memref<1x128xf32, #tpu.memory_space<vmem>>, vector<1x128xf32>
    %4 = vector.broadcast %3 : vector<1x128xf32> to vector<8x128xf32>
    %5 = arith.addf %2, %4 : vector<8x128xf32>
    %cst_5 = arith.constant 0.000000e+00 : f32
    %6 = vector.broadcast %cst_5 : f32 to vector<8x128xf32>
    %7 = arith.maximumf %5, %6 : vector<8x128xf32>
    %c0_6 = arith.constant 0 : index
    %c0_7 = arith.constant 0 : index
    %8 = vector.load %arg5[%c0_6, %c0_7] : memref<8x128xf32, #tpu.memory_space<vmem>>, vector<8x128xf32>
    tpu.vector_store %arg5[%c0_6, %c0_7], %7 {strides = array<i32>} : memref<8x128xf32, #tpu.memory_space<vmem>>, vector<8x128xf32>,
    return
  }
  func.func @transform_0(%arg0: i32, %arg1: i32) -> (i32, i32) {
    %c0_i32 = arith.constant 0 : i32
    %c0_i32_0 = arith.constant 0 : i32
    return %arg0, %c0_i32 : i32, i32
  }
  func.func @transform_1(%arg0: i32, %arg1: i32) -> (i32, i32) {
    %c0_i32 = arith.constant 0 : i32
    %c0_i32_0 = arith.constant 0 : i32
    return %c0_i32, %arg1 : i32, i32
  }
  func.func @transform_2(%arg0: i32, %arg1: i32) -> (i32, i32) {
    %c0_i32 = arith.constant 0 : i32
    %c0_i32_0 = arith.constant 0 : i32
    return %c0_i32, %arg1 : i32, i32
  }
  func.func @transform_3(%arg0: i32, %arg1: i32) -> (i32, i32) {
    %c0_i32 = arith.constant 0 : i32
    return %arg0, %arg1 : i32, i32
  }
}

</mosaic_0001>

<llo_original>
// kernel: tpu_custom_call.1
$region0: #{tpu_custom_call.1}
  #allocation0 [shape = 'u32[]', space=smem, size = 0x4, offset = 0x4, fixed_abs, tag = 'smem constant byte address 0x4 - core index']
  #allocation1 [shape = 'u32[144,128]{1,0:T(1,128)}', space=vmem, size = 0x12000, scoped, tag = 'internal scratch']
  %s0 = inlined_call_operand.hbm [shape: f32[8,256], index: 0, kind: input, shape index: {}]
  %s1 = inlined_call_operand.hbm [shape: f32[256,256], index: 1, kind: input, shape index: {}]
  %s2 = inlined_call_operand.vmem [shape: f32[1,256], index: 2, kind: input, shape index: {}]
  %s3 = inlined_call_operand.hbm [shape: f32[8,256], index: 3, kind: output, shape index: {}]
  %s4 = sld [smem:[#allocation0]]
  $region53: #{tpu_custom_call.1} parent=0
    _
  %s6 = ssub.s32 1, %s4
  %s7 = scalar_select 0, %s6, %s4
  $region1: #{tpu_custom_call.1} parent=0
    #allocation2 [shape = 'u8[8192]{0}', space=vmem, size = 0x2000, scoped, tag = 'input window, operand 0, single buffered']
    #allocation3 [shape = 's32[2]{0}', space=sflag, size = 0x8, scoped, tag = 'scoped memory for tpu_custom_call.1']
    #allocation4 [shape = 's32[2]{0}', space=sflag, size = 0x8, scoped, tag = 'scoped memory for tpu_custom_call.1']
    #allocation5 [shape = 'u8[262144]{0}', space=vmem, size = 0x40000, scoped, tag = 'input window, operand 1']
    #allocation6 [shape = 's32[2]{0}', space=sflag, size = 0x8, scoped, tag = 'scoped memory for tpu_custom_call.1']
    #allocation7 [shape = 'u8[8192]{0}', space=vmem, size = 0x2000, scoped, tag = 'output window, operand 0']
    %8 = vsyncpa [#allocation3], 0
    %9 = vsyncpa [#allocation6], 0
    %s10 = scalar_lea.sflag [#allocation6], 1
    %11 = vsyncpa %s10, 0
    %12 = vsyncpa [#allocation4], 0
    %s13 = scalar_lea.sflag [#allocation4], 1
    %14 = vsyncpa %s13, 0
    loop: start=0, step=1, limit=4
    $region2: #{tpu_custom_call.1} parent=1 // loop_pre_header
      _
    $region3: #{tpu_custom_call.1} parent=1 // loop_header
      %s16 = sphi 0, %s20
      %p17 = scmp.ge.s32.totalorder %s16, 4
      %s23 = sphi 0, %s35
      %s24 = sphi 0, %s31
      %s25 = sphi 0, %s23
      %s26 = sphi 0, %s24
      %s27 = sphi 0, %s25
      %s28 = sphi 0, %s26
      %s38 = sphi 0, %s40
      %s41 = sphi 0, %s38
      %s42 = sphi 0, %s41
      %s58 = sphi 0, %s42
      %s64 = sphi 0, %s66
      %s67 = sphi 0, %s64
      %s68 = sphi 0, %s67
      %s84 = sphi 0, %s68
      %s90 = sphi 0, %s92
      %s93 = sphi 0, %s90
      %s94 = sphi 0, %s93
      %s110 = sphi 0, %s94
      %s118 = sphi 0, %s120
      %s121 = sphi 0, %s118
      %s122 = sphi 0, %s121
      %s138 = sphi 0, %s122
    $region4: #{tpu_custom_call.1} parent=1 // loop_header_branch
      %19 = sbr.rel (%p17) target = $region8
    $region5: #{tpu_custom_call.1} parent=1 // loop_body
      %s21 = ssub.s32 %s16, 1
      %s22 = ssub.s32 %s16, 2
      %s29 = sadd.s32 1, %s24
      %p30 = scmp.ge.s32.totalorder %s29, 2
      %s31 = scalar_select %p30, 0, %s29
      %s32 = sadd.s32 1, %s23
      %s33 = scalar_select %p30, %s32, %s23
      %p34 = scmp.ge.s32.totalorder %s33, 1
      %s35 = scalar_select %p34, 0, %s33
      %s36 = ssub.s32 %s23, %s35
      %p37 = scmp.eq.s32.totalorder %s36, 0
      %s39 = sadd.s32 %s38, 1
      %s40 = scalar_select %p37, %s38, %s39
      %p43 = pneg %p37
      %p44 = scmp.eq.s32.totalorder %s16, 1
      %p45 = por %p43, %p44
      %p46 = scmp.ne.s32.totalorder %s38, %s41
      %p47 = scmp.eq.s32.totalorder %s16, 0
      %p48 = por %p46, %p47
      %p49 = scmp.ne.s32.totalorder %s38, %s41
      %p50 = scmp.eq.s32.totalorder %s21, 1
      %p51 = por %p49, %p50
      %p52 = scmp.ne.s32.totalorder %s41, %s42
      %p53 = scmp.eq.s32.totalorder %s21, 0
      %p54 = por %p52, %p53
      %p55 = scmp.ne.s32.totalorder %s41, %s42
      %p56 = scmp.eq.s32.totalorder %s22, 1
      %p57 = por %p55, %p56
      %p59 = scmp.ne.s32.totalorder %s42, %s58
      %p60 = scmp.eq.s32.totalorder %s22, 0
      %p61 = por %p59, %p60
      %s62 = ssub.s32 %s24, %s31
      %p63 = scmp.eq.s32.totalorder %s62, 0
      %s65 = sadd.s32 %s64, 1
      %s66 = scalar_select %p63, %s64, %s65
      %p69 = pneg %p63
      %p70 = scmp.eq.s32.totalorder %s16, 1
      %p71 = por %p69, %p70
      %p72 = scmp.ne.s32.totalorder %s64, %s67
      %p73 = scmp.eq.s32.totalorder %s16, 0
      %p74 = por %p72, %p73
      %p75 = scmp.ne.s32.totalorder %s64, %s67
      %p76 = scmp.eq.s32.totalorder %s21, 1
      %p77 = por %p75, %p76
      %p78 = scmp.ne.s32.totalorder %s67, %s68
      %p79 = scmp.eq.s32.totalorder %s21, 0
      %p80 = por %p78, %p79
      %p81 = scmp.ne.s32.totalorder %s67, %s68
      %p82 = scmp.eq.s32.totalorder %s22, 1
      %p83 = por %p81, %p82
      %p85 = scmp.ne.s32.totalorder %s68, %s84
      %p86 = scmp.eq.s32.totalorder %s22, 0
      %p87 = por %p85, %p86
      %s88 = ssub.s32 %s24, %s31
      %p89 = scmp.eq.s32.totalorder %s88, 0
      %s91 = sadd.s32 %s90, 1
      %s92 = scalar_select %p89, %s90, %s91
      %p95 = pneg %p89
      %p96 = scmp.eq.s32.totalorder %s16, 1
      %p97 = por %p95, %p96
      %p98 = scmp.ne.s32.totalorder %s90, %s93
      %p99 = scmp.eq.s32.totalorder %s16, 0
      %p100 = por %p98, %p99
      %p101 = scmp.ne.s32.totalorder %s90, %s93
      %p102 = scmp.eq.s32.totalorder %s21, 1
      %p103 = por %p101, %p102
      %p104 = scmp.ne.s32.totalorder %s93, %s94
      %p105 = scmp.eq.s32.totalorder %s21, 0
      %p106 = por %p104, %p105
      %p107 = scmp.ne.s32.totalorder %s93, %s94
      %p108 = scmp.eq.s32.totalorder %s22, 1
      %p109 = por %p107, %p108
      %p111 = scmp.ne.s32.totalorder %s94, %s110
      %p112 = scmp.eq.s32.totalorder %s22, 0
      %p113 = por %p111, %p112
      %s114 = ssub.s32 %s23, %s35
      %s115 = ssub.s32 %s24, %s31
      %s116 = sor.u32 %s114, %s115
      %p117 = scmp.eq.s32.totalorder %s116, 0
      %s119 = sadd.s32 %s118, 1
      %s120 = scalar_select %p117, %s118, %s119
      %p123 = pneg %p117
      %p124 = scmp.eq.s32.totalorder %s16, 1
      %p125 = por %p123, %p124
      %p126 = scmp.ne.s32.totalorder %s118, %s121
      %p127 = scmp.eq.s32.totalorder %s16, 0
      %p128 = por %p126, %p127
      %p129 = scmp.ne.s32.totalorder %s118, %s121
      %p130 = scmp.eq.s32.totalorder %s21, 1
      %p131 = por %p129, %p130
      %p132 = scmp.ne.s32.totalorder %s121, %s122
      %p133 = scmp.eq.s32.totalorder %s21, 0
      %p134 = por %p132, %p133
      %p135 = scmp.ne.s32.totalorder %s121, %s122
      %p136 = scmp.eq.s32.totalorder %s22, 1
      %p137 = por %p135, %p136
      %p139 = scmp.ne.s32.totalorder %s122, %s138
      %p140 = scmp.eq.s32.totalorder %s22, 0
      %p141 = por %p139, %p140
      %p142 = scmp.le.s32.totalorder 1, %s16
      %p143 = scmp.lt.s32.totalorder %s16, 3
      %p144 = pnand %p142, %p143
      %p145 = pneg %p144
      // Predicated region
      $region9: #{tpu_custom_call.1} parent=5 // pred_check
        _
      $region10: #{tpu_custom_call.1} parent=5 // pred_check_branch
        %147 = sbr.rel (%p144) target = $region12
      $region11: #{tpu_custom_call.1} parent=5 // pred_region
        %s148 = ssub.s32 %s16, 1
        // Predicated region
        $region13: #{tpu_custom_call.1} parent=11 // pred_check
          %p149 = pneg %p54
        $region14: #{tpu_custom_call.1} parent=11 // pred_check_branch
          %151 = sbr.rel (%p149) target = $region16
        $region15: #{tpu_custom_call.1} parent=11 // pred_region
          %s153 = ssub.s32 256, 256
          %154 = vsyncadd [#allocation3], %s153
          %s155 = smul.addr %s25, 2
          %s156 = smul.addr %s155, 128
          %s157 = scalar_lea.hbm %s0, %s156
          %s159 = sshll.u32 [#allocation2], 4
          %s160 = int_to_ptr.vmem [resolvable:$true] %s159
          %162 = dma.hbm_to_vmem [thread:$0]  %s157, 256, %s160, [#allocation3]
        $region16: #{tpu_custom_call.1} parent=11 // pred_fallthru
          _
      $region12: #{tpu_custom_call.1} parent=5 // pred_fallthru
        _
      %p163 = scmp.lt.s32.totalorder %s16, 2
      // Predicated region
      $region17: #{tpu_custom_call.1} parent=5 // pred_check
        %p164 = pneg %p163
      $region18: #{tpu_custom_call.1} parent=5 // pred_check_branch
        %166 = sbr.rel (%p164) target = $region20
      $region19: #{tpu_custom_call.1} parent=5 // pred_region
        // Predicated region
        $region21: #{tpu_custom_call.1} parent=19 // pred_check
          %p167 = pneg %p74
        $region22: #{tpu_custom_call.1} parent=19 // pred_check_branch
          %169 = sbr.rel (%p167) target = $region24
        $region23: #{tpu_custom_call.1} parent=19 // pred_region
          %s170 = sand.u32 %s64, 1
          %s171 = scalar_lea.sflag [#allocation6], %s170
          %s172 = sand.u32 %s64, 1
          %s173 = smul.addr %s172, 256
          %s174 = scalar_lea.vmem [#allocation5], %s173
          %s176 = ssub.s32 4096, 4096
          %177 = vsyncadd %s171, %s176
          %s178 = smul.addr %s24, 128
          %s179 = scalar_lea.hbm %s1, %s178
          %s180 = sshll.u32 %s174, 4
          %s181 = int_to_ptr.vmem [resolvable:$true] %s180
          %186 = dma.hbm_to_vmem [thread:$0]  %s179, 4096, %s181, %s171, 256, 128, 8
        $region24: #{tpu_custom_call.1} parent=19 // pred_fallthru
          _
        // Predicated region
        $region25: #{tpu_custom_call.1} parent=19 // pred_check
          %p187 = pneg %p100
        $region26: #{tpu_custom_call.1} parent=19 // pred_check_branch
          %189 = sbr.rel (%p187) target = $region28
        $region27: #{tpu_custom_call.1} parent=19 // pred_region
          %p190 = scmp.lt.s32.totalorder %s24, 1
          %s191 = scalar_select %p190, %s24, 1
          %s192 = scalar_lea.vmem %s2, %s191
        $region28: #{tpu_custom_call.1} parent=19 // pred_fallthru
          _
      $region20: #{tpu_custom_call.1} parent=5 // pred_fallthru
        _
      %p193 = scmp.le.s32.totalorder 1, %s16
      %p194 = scmp.lt.s32.totalorder %s16, 3
      %p195 = pnand %p193, %p194
      %p196 = pneg %p195
      // Predicated region
      $region29: #{tpu_custom_call.1} parent=5 // pred_check
        _
      $region30: #{tpu_custom_call.1} parent=5 // pred_check_branch
        %198 = sbr.rel (%p195) target = $region32
      $region31: #{tpu_custom_call.1} parent=5 // pred_region
        %s199 = ssub.s32 %s16, 1
        // Predicated region
        $region33: #{tpu_custom_call.1} parent=31 // pred_check
          %p200 = pneg %p54
        $region34: #{tpu_custom_call.1} parent=31 // pred_check_branch
          %202 = sbr.rel (%p200) target = $region36
        $region35: #{tpu_custom_call.1} parent=31 // pred_region
          %203 = dma.done [#allocation3], 256
        $region36: #{tpu_custom_call.1} parent=31 // pred_fallthru
          _
        %s204 = sand.u32 %s67, 1
        %s205 = scalar_lea.sflag [#allocation6], %s204
        %s206 = sand.u32 %s67, 1
        %s207 = smul.addr %s206, 256
        %s208 = scalar_lea.vmem [#allocation5], %s207
        // Predicated region
        $region37: #{tpu_custom_call.1} parent=31 // pred_check
          %p209 = pneg %p80
        $region38: #{tpu_custom_call.1} parent=31 // pred_check_branch
          %211 = sbr.rel (%p209) target = $region40
        $region39: #{tpu_custom_call.1} parent=31 // pred_region
          %212 = dma.done %s205, 4096
        $region40: #{tpu_custom_call.1} parent=31 // pred_fallthru
          _
        %p213 = pneg %p54
        %p214 = pneg %p51
        %s215 = sand.u32 %s67, 1
        %s216 = scalar_lea.sflag [#allocation6], %s215
        %s217 = sand.u32 %s67, 1
        %s218 = smul.addr %s217, 256
        %s219 = scalar_lea.vmem [#allocation5], %s218
        %p220 = pneg %p80
        %p221 = pneg %p77
        %p222 = scmp.lt.s32.totalorder %s26, 1
        %s223 = scalar_select %p222, %s26, 1
        %s224 = scalar_lea.vmem %s2, %s223
        %p225 = pneg %p106
        %p226 = pneg %p103
        %p227 = pneg %p134
        %p228 = pneg %p131
        %s229 = sand.u32 %s121, 1
        %s230 = scalar_lea.sflag [#allocation4], %s229
        %s231 = sand.u32 %s121, 1
        %s232 = smul.addr %s231, 8
        %s233 = scalar_lea.vmem [#allocation7], %s232
        %p234 = scmp.lt.s32.totalorder %s26, 1
        %s235 = scalar_select %p234, %s26, 1
        %s236 = scalar_lea.vmem %s2, %s235
        %v237 = vld [vmem:[#allocation2] sm:$0xff]
        %v238 = vld [vmem:[#allocation2 + $0x8] sm:$0xff]
        %v239 = vld [vmem:[%s208] sm:$0xff]
        %v240 = vld [vmem:[%s208 + $0x8] sm:$0xff]
        %v241 = vld [vmem:[%s208 + $0x10] sm:$0xff]
        %v242 = vld [vmem:[%s208 + $0x18] sm:$0xff]
        %v243 = vld [vmem:[%s208 + $0x20] sm:$0xff]
        %v244 = vld [vmem:[%s208 + $0x28] sm:$0xff]
        %v245 = vld [vmem:[%s208 + $0x30] sm:$0xff]
        %v246 = vld [vmem:[%s208 + $0x38] sm:$0xff]
        %v247 = vld [vmem:[%s208 + $0x40] sm:$0xff]
        %v248 = vld [vmem:[%s208 + $0x48] sm:$0xff]
        %v249 = vld [vmem:[%s208 + $0x50] sm:$0xff]
        %v250 = vld [vmem:[%s208 + $0x58] sm:$0xff]
        %v251 = vld [vmem:[%s208 + $0x60] sm:$0xff]
        %v252 = vld [vmem:[%s208 + $0x68] sm:$0xff]
        %v253 = vld [vmem:[%s208 + $0x70] sm:$0xff]
        %v254 = vld [vmem:[%s208 + $0x78] sm:$0xff]
        %v255 = vld [vmem:[%s208 + $0x80] sm:$0xff]
        %v256 = vld [vmem:[%s208 + $0x88] sm:$0xff]
        %v257 = vld [vmem:[%s208 + $0x90] sm:$0xff]
        %v258 = vld [vmem:[%s208 + $0x98] sm:$0xff]
        %v259 = vld [vmem:[%s208 + $0xa0] sm:$0xff]
        %v260 = vld [vmem:[%s208 + $0xa8] sm:$0xff]
        %v261 = vld [vmem:[%s208 + $0xb0] sm:$0xff]
        %v262 = vld [vmem:[%s208 + $0xb8] sm:$0xff]
        %v263 = vld [vmem:[%s208 + $0xc0] sm:$0xff]
        %v264 = vld [vmem:[%s208 + $0xc8] sm:$0xff]
        %v265 = vld [vmem:[%s208 + $0xd0] sm:$0xff]
        %v266 = vld [vmem:[%s208 + $0xd8] sm:$0xff]
        %v267 = vld [vmem:[%s208 + $0xe0] sm:$0xff]
        %v268 = vld [vmem:[%s208 + $0xe8] sm:$0xff]
        %v269 = vld [vmem:[%s208 + $0xf0] sm:$0xff]
        %v270 = vld [vmem:[%s208 + $0xf8] sm:$0xff]
        %v271 = vld [vmem:[%s236] sm:$0x1]
        %v273 = vlaneseq
        %v274 = vshrl.u32 %v273, 7
        %v275 = vsub.s32 0, %v274
        %v276 = vrot.slane %v271, %v275
        %278 = vmatprep.subr.mxu0 0.0
        %279 = vmatpush1.msra.mxu0 %v239
        %280 = vmatprep.subr.mxu0 0.0
        %281 = vmatpush1.msra.mxu0 %v240
        %282 = vmatprep.subr.mxu0 0.0
        %283 = vmatpush1.msra.mxu0 %v241
        %284 = vmatprep.subr.mxu0 0.0
        %285 = vmatpush1.msra.mxu0 %v242
        %286 = vmatprep.subr.mxu0 0.0
        %287 = vmatpush1.msra.mxu0 %v243
        %288 = vmatprep.subr.mxu0 0.0
        %289 = vmatpush1.msra.mxu0 %v244
        %290 = vmatprep.subr.mxu0 0.0
        %291 = vmatpush1.msra.mxu0 %v245
        %292 = vmatprep.subr.mxu0 0.0
        %293 = vmatpush1.msra.mxu0 %v246
        %294 = vmatprep.subr.mxu0 0.0
        %295 = vmatpush1.msra.mxu0 %v247
        %296 = vmatprep.subr.mxu0 0.0
        %297 = vmatpush1.msra.mxu0 %v248
        %298 = vmatprep.subr.mxu0 0.0
        %299 = vmatpush1.msra.mxu0 %v249
        %300 = vmatprep.subr.mxu0 0.0
        %301 = vmatpush1.msra.mxu0 %v250
        %302 = vmatprep.subr.mxu0 0.0
        %303 = vmatpush1.msra.mxu0 %v251
        %304 = vmatprep.subr.mxu0 0.0
        %305 = vmatpush1.msra.mxu0 %v252
        %306 = vmatprep.subr.mxu0 0.0
        %307 = vmatpush1.msra.mxu0 %v253
        %308 = vmatprep.subr.mxu0 0.0
        %309 = vmatpush1.msra.mxu0 %v254
        %310 = vmatprep.subr.mxu0 0.0
        %311 = vmatpush1.msra.mxu0 %v255
        %312 = vmatprep.subr.mxu0 0.0
        %313 = vmatpush1.msra.mxu0 %v256
        %314 = vmatprep.subr.mxu0 0.0
        %315 = vmatpush1.msra.mxu0 %v257
        %316 = vmatprep.subr.mxu0 0.0
        %317 = vmatpush1.msra.mxu0 %v258
        %318 = vmatprep.subr.mxu0 0.0
        %319 = vmatpush1.msra.mxu0 %v259
        %320 = vmatprep.subr.mxu0 0.0
        %321 = vmatpush1.msra.mxu0 %v260
        %322 = vmatprep.subr.mxu0 0.0
        %323 = vmatpush1.msra.mxu0 %v261
        %324 = vmatprep.subr.mxu0 0.0
        %325 = vmatpush1.msra.mxu0 %v262
        %326 = vmatprep.subr.mxu0 0.0
        %327 = vmatpush1.msra.mxu0 %v263
        %328 = vmatprep.subr.mxu0 0.0
        %329 = vmatpush1.msra.mxu0 %v264
        %330 = vmatprep.subr.mxu0 0.0
        %331 = vmatpush1.msra.mxu0 %v265
        %332 = vmatprep.subr.mxu0 0.0
        %333 = vmatpush1.msra.mxu0 %v266
        %334 = vmatprep.subr.mxu0 0.0
        %335 = vmatpush1.msra.mxu0 %v267
        %336 = vmatprep.subr.mxu0 0.0
        %337 = vmatpush1.msra.mxu0 %v268
        %338 = vmatprep.subr.mxu0 0.0
        %339 = vmatpush1.msra.mxu0 %v269
        %340 = vmatprep.subr.mxu0 0.0
        %341 = vmatpush1.msra.mxu0 %v270
        %342 = vmatprep.mubr.f32.mxu0 %v238
        %343 = vmatmul.mubr.f32.gmra.mrb[0].mxu0 %v237
        %v344 = vpop.f32.mrb[0].mxu0
        %v345 = vadd.f32 %v276, %v344
        %v346 = vpop.f32.mrb[0].mxu0
        %347 = vdwg.mxu0
        %v348 = vmax.f32 %v345, 0.0
        %349 = vst [vmem:[%s233] sm:$0xff] %v348
        %s350 = sand.u32 %s121, 1
        %s351 = scalar_lea.sflag [#allocation4], %s350
        %s352 = sand.u32 %s121, 1
        %s353 = smul.addr %s352, 8
        %s354 = scalar_lea.vmem [#allocation7], %s353
        // Predicated region
        $region41: #{tpu_custom_call.1} parent=31 // pred_check
          %p355 = pneg %p131
        $region42: #{tpu_custom_call.1} parent=31 // pred_check_branch
          %357 = sbr.rel (%p355) target = $region44
        $region43: #{tpu_custom_call.1} parent=31 // pred_region
          %s359 = ssub.s32 128, 128
          %360 = vsyncadd %s351, %s359
          %s361 = smul.addr %s25, 2
          %s362 = sadd.s32 %s26, %s361
          %s363 = smul.addr %s362, 128
          %s364 = scalar_lea.hbm %s3, %s363
          %s366 = sshll.u32 %s354, 4
          %s367 = int_to_ptr.vmem [resolvable:$true] %s366
          %369 = dma.vmem_to_hbm [thread:$0]  %s367, 128, %s364, %s351
        $region44: #{tpu_custom_call.1} parent=31 // pred_fallthru
          _
      $region32: #{tpu_custom_call.1} parent=5 // pred_fallthru
        _
      %p370 = scmp.le.s32.totalorder 2, %s16
      // Predicated region
      $region45: #{tpu_custom_call.1} parent=5 // pred_check
        %p371 = pneg %p370
      $region46: #{tpu_custom_call.1} parent=5 // pred_check_branch
        %373 = sbr.rel (%p371) target = $region48
      $region47: #{tpu_custom_call.1} parent=5 // pred_region
        %s374 = ssub.s32 %s16, 2
        // Predicated region
        $region49: #{tpu_custom_call.1} parent=47 // pred_check
          %p375 = pneg %p137
        $region50: #{tpu_custom_call.1} parent=47 // pred_check_branch
          %377 = sbr.rel (%p375) target = $region52
        $region51: #{tpu_custom_call.1} parent=47 // pred_region
          %s378 = sand.u32 %s122, 1
          %s379 = scalar_lea.sflag [#allocation4], %s378
          %s380 = sand.u32 %s122, 1
          %s381 = smul.addr %s380, 8
          %s382 = scalar_lea.vmem [#allocation7], %s381
          %383 = dma.done %s379, 128
        $region52: #{tpu_custom_call.1} parent=47 // pred_fallthru
          _
      $region48: #{tpu_custom_call.1} parent=5 // pred_fallthru
        _
    $region6: #{tpu_custom_call.1} parent=1 // loop_footer
      %s20 = sadd.s32 1, %s16
    $region7: #{tpu_custom_call.1} parent=1 // loop_footer_branch
      %15 = sbr.rel target = $region3
    $region8: #{tpu_custom_call.1} parent=1 // loop_exit
      _
    %384 = vsyncpa [#allocation3], 1
    %s385 = scalar_lea.sflag [#allocation3], 1
    %386 = vsyncpa %s385, 1
    %387 = vsyncpa [#allocation6], 1
    %s388 = scalar_lea.sflag [#allocation6], 1
    %389 = vsyncpa %s388, 1
    %390 = vsyncpa [#allocation4], 1
    %s391 = scalar_lea.sflag [#allocation4], 1
    %392 = vsyncpa %s391, 1

</llo_original>
